<compile_context>
chip_gen: v6e
topology: v6e:2x2x1
jax: 0.10.0
libtpu: 0.0.40
codegen_flags: <defaults>
</compile_context>

<pallas_src>
import jax
import jax.numpy as jnp
from jax.experimental import pallas as pl
from jax.experimental.pallas import tpu as pltpu


def _abs_kernel(x_ref, o_ref):
    # Pure elementwise VPU op on the whole VMEM tile.
    o_ref[...] = jnp.abs(x_ref[...])


_LANES = 1024                  # lane-dense last dim: large multiple of 128
_TARGET_BLOCK_BYTES = 4 << 20  # ~4 MiB per array per grid block
_SMALL_BYTES = 256 << 10       # below this, fused XLA abs wins


def _sublane_multiple(itemsize: int) -> int:
    # f32 -> 8 rows, bf16/f16 -> 16, int8/fp8 -> 32 (sub-32-bit packs sublanes).
    return 8 * max(1, 4 // itemsize)


def abs_pallas(x: jax.Array, *, donate_input: bool = False) -> jax.Array:
    """Elementwise absolute value via a tiled, lane-dense Pallas TPU kernel."""
    orig_shape = x.shape
    dtype = x.dtype
    n = x.size
    if n == 0:
        return x

    # TODO(synk): complex |x| changes dtype, and 4-bit dtypes need 64-row
    # sublane packing; fall back to XLA for those.
    if jnp.issubdtype(dtype, jnp.complexfloating):
        return jnp.abs(x)
    if jnp.dtype(dtype).name in ("int4", "uint4", "float4_e2m1fn"):
        return jnp.abs(x)

    itemsize = jnp.dtype(dtype).itemsize
    # Tiny tensors: custom-call launch + reshape overhead dominates.
    if n * itemsize < _SMALL_BYTES:
        return jnp.abs(x)

    sub = _sublane_multiple(itemsize)
    rows = pl.cdiv(n, _LANES)

    # Block size targeted in bytes, rounded down to a sublane multiple.
    max_tile_rows = max(sub, (_TARGET_BLOCK_BYTES // (_LANES * itemsize)) // sub * sub)
    if rows <= max_tile_rows:
        # Whole array fits in one max block: split it in two so v7x's two
        # TensorCores both get work (grid >= 2 when rows allows it).
        half = pl.cdiv(rows, 2)
        tile_rows = min(rows, max(sub, pl.cdiv(half, sub) * sub))
    else:
        tile_rows = max_tile_rows

    # Pad only to the next 1024-element boundary when needed (<= 4 KiB of
    # zeros; abs(0)=0 and the tail is sliced off afterwards). The final grid
    # block may be ragged — Pallas masks its out-of-bounds rows.
    flat = x.reshape(-1)
    padded = rows * _LANES
    if padded != n:
        flat = jnp.pad(flat, (0, padded - n))
    x2 = flat.reshape(rows, _LANES)

    grid = (pl.cdiv(rows, tile_rows),)

    out2 = pl.pallas_call(
        _abs_kernel,
        out_shape=jax.ShapeDtypeStruct((rows, _LANES), dtype),
        grid=grid,
        in_specs=[pl.BlockSpec((tile_rows, _LANES), lambda i: (i, 0))],
        out_specs=pl.BlockSpec((tile_rows, _LANES), lambda i: (i, 0)),
        compiler_params=pltpu.CompilerParams(
            dimension_semantics=("parallel",),  # shards grid over 2 TCs on v7x
            vmem_limit_bytes=40 << 20,          # 4 MiB blocks * 4 buffers + headroom
        ),
        cost_estimate=pl.CostEstimate(
            flops=padded, transcendentals=0, bytes_accessed=2 * padded * itemsize),
        input_output_aliases=({0: 0} if donate_input else {}),
    )(x2)

    out_flat = out2.reshape(-1)
    if padded != n:
        out_flat = out_flat[:n]
    return out_flat.reshape(orig_shape)


if __name__ == "__main__":
    key = jax.random.PRNGKey(0)
    k1, k2, k3, k4 = jax.random.split(key, 4)

    # Primary shape from the module spec (NCHW: batch=2, channels=4, 16x16).
    # Small enough that it takes the fused-XLA fallback path.
    x_small = jax.random.normal(k1, (2, 4, 16, 16), dtype=jnp.float32)

    # Larger inputs that exercise the Pallas kernel itself:
    #  - 1024-divisible element count (no pad, no tail slice, 2 full blocks)
    #  - ragged element count (small pad + ragged last block)
    #  - bf16 (different sublane packing / tile_rows)
    x_even = jax.random.normal(k2, (2, 4, 128, 128), dtype=jnp.float32)
    x_ragged = jax.random.normal(k3, (2, 4, 100, 100), dtype=jnp.float32)
    x_bf16 = jax.random.normal(k4, (4, 4, 128, 128), dtype=jnp.bfloat16)

    for xin in (x_small, x_even, x_ragged, x_bf16):
        out = abs_pallas(xin)
        jax.block_until_ready(out)
        ref = jnp.abs(xin)
        assert out.shape == ref.shape and out.dtype == ref.dtype
        assert jnp.array_equal(out, ref)

    print("KERNEL_OK")
</pallas_src>

<mosaic_0001>
module attributes {stable_mosaic.version = 11 : i64} {
  func.func @_abs_kernel(%arg0: i32, %arg1: memref<64x1024xf32, #tpu.memory_space<vmem>>, %arg2: memref<64x1024xf32, #tpu.memory_space<vmem>>) attributes {dimension_semantics = [#tpu.dimension_semantics<parallel>], iteration_bounds = array<i64: 2>, scalar_prefetch = 0 : i64, scratch_operands = 0 : i64, tpu.core_type = #tpu.core_type<tc>, window_params = [{transform_indices = @transform_0, window_bounds = array<i64: 64, 1024>}, {transform_indices = @transform_1, window_bounds = array<i64: 64, 1024>}]} {
    %c0 = arith.constant 0 : index
    %c0_0 = arith.constant 0 : index
    %0 = vector.load %arg1[%c0, %c0_0] : memref<64x1024xf32, #tpu.memory_space<vmem>>, vector<64x1024xf32>
    %1 = math.absf %0 : vector<64x1024xf32>
    %c0_1 = arith.constant 0 : index
    %c0_2 = arith.constant 0 : index
    %2 = vector.load %arg2[%c0_1, %c0_2] : memref<64x1024xf32, #tpu.memory_space<vmem>>, vector<64x1024xf32>
    tpu.vector_store %arg2[%c0_1, %c0_2], %1 {strides = array<i32>} : memref<64x1024xf32, #tpu.memory_space<vmem>>, vector<64x1024xf32>,
    return
  }
  func.func @transform_0(%arg0: i32) -> (i32, i32) {
    %c0_i32 = arith.constant 0 : i32
    %c0_i32_0 = arith.constant 0 : i32
    return %arg0, %c0_i32 : i32, i32
  }
  func.func @transform_1(%arg0: i32) -> (i32, i32) {
    %c0_i32 = arith.constant 0 : i32
    %c0_i32_0 = arith.constant 0 : i32
    return %arg0, %c0_i32 : i32, i32
  }
}

</mosaic_0001>

<llo_original>
// kernel: tpu_custom_call.1
$region0: #{tpu_custom_call.1}
  #allocation0 [shape = 'u32[]', space=smem, size = 0x4, offset = 0x4, fixed_abs, tag = 'smem constant byte address 0x4 - core index']
  #allocation1 [shape = 'u32[144,128]{1,0:T(1,128)}', space=vmem, size = 0x12000, scoped, tag = 'internal scratch']
  %s0 = inlined_call_operand.hbm [shape: f32[128,1024], index: 0, kind: input, shape index: {}]
  %s1 = inlined_call_operand.hbm [shape: f32[128,1024], index: 1, kind: output, shape index: {}]
  %s2 = sld [smem:[#allocation0]]
  $region41: #{tpu_custom_call.1} parent=0
    _
  %s4 = ssub.s32 1, %s2
  %s5 = scalar_select 0, %s4, %s2
  $region1: #{tpu_custom_call.1} parent=0
    #allocation2 [shape = 'u8[524288]{0}', space=vmem, size = 0x80000, scoped, tag = 'input window, operand 0']
    #allocation3 [shape = 's32[2]{0}', space=sflag, size = 0x8, scoped, tag = 'scoped memory for tpu_custom_call.1']
    #allocation4 [shape = 's32[2]{0}', space=sflag, size = 0x8, scoped, tag = 'scoped memory for tpu_custom_call.1']
    #allocation5 [shape = 'u8[524288]{0}', space=vmem, size = 0x80000, scoped, tag = 'output window, operand 0']
    %6 = vsyncpa [#allocation3], 0
    %s7 = scalar_lea.sflag [#allocation3], 1
    %8 = vsyncpa %s7, 0
    %9 = vsyncpa [#allocation4], 0
    %s10 = scalar_lea.sflag [#allocation4], 1
    %11 = vsyncpa %s10, 0
    loop: start=0, step=1, limit=4
    $region2: #{tpu_custom_call.1} parent=1 // loop_pre_header
      _
    $region3: #{tpu_custom_call.1} parent=1 // loop_header
      %s13 = sphi 0, %s17
      %p14 = scmp.ge.s32.totalorder %s13, 4
      %s23 = sphi 0, %s25
      %s26 = sphi 0, %s23
      %s27 = sphi 0, %s26
      %s43 = sphi 0, %s27
      %s49 = sphi 0, %s51
      %s52 = sphi 0, %s49
      %s53 = sphi 0, %s52
      %s69 = sphi 0, %s53
    $region4: #{tpu_custom_call.1} parent=1 // loop_header_branch
      %16 = sbr.rel (%p14) target = $region8
    $region5: #{tpu_custom_call.1} parent=1 // loop_body
      %s18 = ssub.s32 %s13, 1
      %s19 = ssub.s32 %s13, 2
      %s20 = sadd.s32 %s13, 1
      %s21 = ssub.s32 %s13, %s20
      %p22 = scmp.eq.s32.totalorder %s21, 0
      %s24 = sadd.s32 %s23, 1
      %s25 = scalar_select %p22, %s23, %s24
      %p28 = pneg %p22
      %p29 = scmp.eq.s32.totalorder %s13, 1
      %p30 = por %p28, %p29
      %p31 = scmp.ne.s32.totalorder %s23, %s26
      %p32 = scmp.eq.s32.totalorder %s13, 0
      %p33 = por %p31, %p32
      %p34 = scmp.ne.s32.totalorder %s23, %s26
      %p35 = scmp.eq.s32.totalorder %s18, 1
      %p36 = por %p34, %p35
      %p37 = scmp.ne.s32.totalorder %s26, %s27
      %p38 = scmp.eq.s32.totalorder %s18, 0
      %p39 = por %p37, %p38
      %p40 = scmp.ne.s32.totalorder %s26, %s27
      %p41 = scmp.eq.s32.totalorder %s19, 1
      %p42 = por %p40, %p41
      %p44 = scmp.ne.s32.totalorder %s27, %s43
      %p45 = scmp.eq.s32.totalorder %s19, 0
      %p46 = por %p44, %p45
      %s47 = ssub.s32 %s13, %s20
      %p48 = scmp.eq.s32.totalorder %s47, 0
      %s50 = sadd.s32 %s49, 1
      %s51 = scalar_select %p48, %s49, %s50
      %p54 = pneg %p48
      %p55 = scmp.eq.s32.totalorder %s13, 1
      %p56 = por %p54, %p55
      %p57 = scmp.ne.s32.totalorder %s49, %s52
      %p58 = scmp.eq.s32.totalorder %s13, 0
      %p59 = por %p57, %p58
      %p60 = scmp.ne.s32.totalorder %s49, %s52
      %p61 = scmp.eq.s32.totalorder %s18, 1
      %p62 = por %p60, %p61
      %p63 = scmp.ne.s32.totalorder %s52, %s53
      %p64 = scmp.eq.s32.totalorder %s18, 0
      %p65 = por %p63, %p64
      %p66 = scmp.ne.s32.totalorder %s52, %s53
      %p67 = scmp.eq.s32.totalorder %s19, 1
      %p68 = por %p66, %p67
      %p70 = scmp.ne.s32.totalorder %s53, %s69
      %p71 = scmp.eq.s32.totalorder %s19, 0
      %p72 = por %p70, %p71
      %p73 = scmp.le.s32.totalorder 1, %s13
      %p74 = scmp.lt.s32.totalorder %s13, 3
      %p75 = pnand %p73, %p74
      %p76 = pneg %p75
      // Predicated region
      $region9: #{tpu_custom_call.1} parent=5 // pred_check
        _
      $region10: #{tpu_custom_call.1} parent=5 // pred_check_branch
        %78 = sbr.rel (%p75) target = $region12
      $region11: #{tpu_custom_call.1} parent=5 // pred_region
        %s79 = ssub.s32 %s13, 1
      $region12: #{tpu_custom_call.1} parent=5 // pred_fallthru
        _
      %p80 = scmp.lt.s32.totalorder %s13, 2
      // Predicated region
      $region13: #{tpu_custom_call.1} parent=5 // pred_check
        %p81 = pneg %p80
      $region14: #{tpu_custom_call.1} parent=5 // pred_check_branch
        %83 = sbr.rel (%p81) target = $region16
      $region15: #{tpu_custom_call.1} parent=5 // pred_region
        // Predicated region
        $region17: #{tpu_custom_call.1} parent=15 // pred_check
          %p84 = pneg %p33
        $region18: #{tpu_custom_call.1} parent=15 // pred_check_branch
          %86 = sbr.rel (%p84) target = $region20
        $region19: #{tpu_custom_call.1} parent=15 // pred_region
          %s87 = sand.u32 %s23, 1
          %s88 = scalar_lea.sflag [#allocation3], %s87
          %s89 = sand.u32 %s23, 1
          %s90 = smul.addr %s89, 512
          %s91 = scalar_lea.vmem [#allocation2], %s90
          %s92 = smul.u32 8, %s13
          %s94 = ssub.s32 8192, 8192
          %95 = vsyncadd %s88, %s94
          %s96 = smul.addr %s92, 8
          %s97 = smul.addr %s96, 128
          %s98 = scalar_lea.hbm %s0, %s97
          %s99 = sshll.u32 %s91, 4
          %s100 = int_to_ptr.vmem [resolvable:$true] %s99
          %105 = dma.hbm_to_vmem [thread:$0]  %s98, 8192, %s100, %s88, 1024, 1024, 64
        $region20: #{tpu_custom_call.1} parent=15 // pred_fallthru
          _
      $region16: #{tpu_custom_call.1} parent=5 // pred_fallthru
        _
      %p106 = scmp.le.s32.totalorder 1, %s13
      %p107 = scmp.lt.s32.totalorder %s13, 3
      %p108 = pnand %p106, %p107
      %p109 = pneg %p108
      // Predicated region
      $region21: #{tpu_custom_call.1} parent=5 // pred_check
        _
      $region22: #{tpu_custom_call.1} parent=5 // pred_check_branch
        %111 = sbr.rel (%p108) target = $region24
      $region23: #{tpu_custom_call.1} parent=5 // pred_region
        %s112 = ssub.s32 %s13, 1
        %s113 = sand.u32 %s26, 1
        %s114 = scalar_lea.sflag [#allocation3], %s113
        %s115 = sand.u32 %s26, 1
        %s116 = smul.addr %s115, 512
        %s117 = scalar_lea.vmem [#allocation2], %s116
        // Predicated region
        $region25: #{tpu_custom_call.1} parent=23 // pred_check
          %p118 = pneg %p39
        $region26: #{tpu_custom_call.1} parent=23 // pred_check_branch
          %120 = sbr.rel (%p118) target = $region28
        $region27: #{tpu_custom_call.1} parent=23 // pred_region
          %121 = dma.done %s114, 8192
        $region28: #{tpu_custom_call.1} parent=23 // pred_fallthru
          _
        %s122 = sand.u32 %s26, 1
        %s123 = scalar_lea.sflag [#allocation3], %s122
        %s124 = sand.u32 %s26, 1
        %s125 = smul.addr %s124, 512
        %s126 = scalar_lea.vmem [#allocation2], %s125
        %p127 = pneg %p39
        %p128 = pneg %p36
        %p129 = pneg %p65
        %p130 = pneg %p62
        %s131 = sand.u32 %s52, 1
        %s132 = scalar_lea.sflag [#allocation4], %s131
        %s133 = sand.u32 %s52, 1
        %s134 = smul.addr %s133, 512
        %s135 = scalar_lea.vmem [#allocation5], %s134
        %s136 = smul.u32 8, %s18
        %s137 = smul.u32 8, %s18
        %v138 = vld [vmem:[%s117] sm:$0xff]
        %v139 = vld [vmem:[%s117 + $0x8] sm:$0xff]
        %v140 = vld [vmem:[%s117 + $0x10] sm:$0xff]
        %v141 = vld [vmem:[%s117 + $0x18] sm:$0xff]
        %v142 = vld [vmem:[%s117 + $0x20] sm:$0xff]
        %v143 = vld [vmem:[%s117 + $0x28] sm:$0xff]
        %v144 = vld [vmem:[%s117 + $0x30] sm:$0xff]
        %v145 = vld [vmem:[%s117 + $0x38] sm:$0xff]
        %v146 = vld [vmem:[%s117 + $0x40] sm:$0xff]
        %v147 = vld [vmem:[%s117 + $0x48] sm:$0xff]
        %v148 = vld [vmem:[%s117 + $0x50] sm:$0xff]
        %v149 = vld [vmem:[%s117 + $0x58] sm:$0xff]
        %v150 = vld [vmem:[%s117 + $0x60] sm:$0xff]
        %v151 = vld [vmem:[%s117 + $0x68] sm:$0xff]
        %v152 = vld [vmem:[%s117 + $0x70] sm:$0xff]
        %v153 = vld [vmem:[%s117 + $0x78] sm:$0xff]
        %v154 = vld [vmem:[%s117 + $0x80] sm:$0xff]
        %v155 = vld [vmem:[%s117 + $0x88] sm:$0xff]
        %v156 = vld [vmem:[%s117 + $0x90] sm:$0xff]
        %v157 = vld [vmem:[%s117 + $0x98] sm:$0xff]
        %v158 = vld [vmem:[%s117 + $0xa0] sm:$0xff]
        %v159 = vld [vmem:[%s117 + $0xa8] sm:$0xff]
        %v160 = vld [vmem:[%s117 + $0xb0] sm:$0xff]
        %v161 = vld [vmem:[%s117 + $0xb8] sm:$0xff]
        %v162 = vld [vmem:[%s117 + $0xc0] sm:$0xff]
        %v163 = vld [vmem:[%s117 + $0xc8] sm:$0xff]
        %v164 = vld [vmem:[%s117 + $0xd0] sm:$0xff]
        %v165 = vld [vmem:[%s117 + $0xd8] sm:$0xff]
        %v166 = vld [vmem:[%s117 + $0xe0] sm:$0xff]
        %v167 = vld [vmem:[%s117 + $0xe8] sm:$0xff]
        %v168 = vld [vmem:[%s117 + $0xf0] sm:$0xff]
        %v169 = vld [vmem:[%s117 + $0xf8] sm:$0xff]
        %v170 = vld [vmem:[%s117 + $0x100] sm:$0xff]
        %v171 = vld [vmem:[%s117 + $0x108] sm:$0xff]
        %v172 = vld [vmem:[%s117 + $0x110] sm:$0xff]
        %v173 = vld [vmem:[%s117 + $0x118] sm:$0xff]
        %v174 = vld [vmem:[%s117 + $0x120] sm:$0xff]
        %v175 = vld [vmem:[%s117 + $0x128] sm:$0xff]
        %v176 = vld [vmem:[%s117 + $0x130] sm:$0xff]
        %v177 = vld [vmem:[%s117 + $0x138] sm:$0xff]
        %v178 = vld [vmem:[%s117 + $0x140] sm:$0xff]
        %v179 = vld [vmem:[%s117 + $0x148] sm:$0xff]
        %v180 = vld [vmem:[%s117 + $0x150] sm:$0xff]
        %v181 = vld [vmem:[%s117 + $0x158] sm:$0xff]
        %v182 = vld [vmem:[%s117 + $0x160] sm:$0xff]
        %v183 = vld [vmem:[%s117 + $0x168] sm:$0xff]
        %v184 = vld [vmem:[%s117 + $0x170] sm:$0xff]
        %v185 = vld [vmem:[%s117 + $0x178] sm:$0xff]
        %v186 = vld [vmem:[%s117 + $0x180] sm:$0xff]
        %v187 = vld [vmem:[%s117 + $0x188] sm:$0xff]
        %v188 = vld [vmem:[%s117 + $0x190] sm:$0xff]
        %v189 = vld [vmem:[%s117 + $0x198] sm:$0xff]
        %v190 = vld [vmem:[%s117 + $0x1a0] sm:$0xff]
        %v191 = vld [vmem:[%s117 + $0x1a8] sm:$0xff]
        %v192 = vld [vmem:[%s117 + $0x1b0] sm:$0xff]
        %v193 = vld [vmem:[%s117 + $0x1b8] sm:$0xff]
        %v194 = vld [vmem:[%s117 + $0x1c0] sm:$0xff]
        %v195 = vld [vmem:[%s117 + $0x1c8] sm:$0xff]
        %v196 = vld [vmem:[%s117 + $0x1d0] sm:$0xff]
        %v197 = vld [vmem:[%s117 + $0x1d8] sm:$0xff]
        %v198 = vld [vmem:[%s117 + $0x1e0] sm:$0xff]
        %v199 = vld [vmem:[%s117 + $0x1e8] sm:$0xff]
        %v200 = vld [vmem:[%s117 + $0x1f0] sm:$0xff]
        %v201 = vld [vmem:[%s117 + $0x1f8] sm:$0xff]
        %v202 = vand.u32 2147483647, %v138
        %v203 = vand.u32 2147483647, %v139
        %v204 = vand.u32 2147483647, %v140
        %v205 = vand.u32 2147483647, %v141
        %v206 = vand.u32 2147483647, %v142
        %v207 = vand.u32 2147483647, %v143
        %v208 = vand.u32 2147483647, %v144
        %v209 = vand.u32 2147483647, %v145
        %v210 = vand.u32 2147483647, %v146
        %v211 = vand.u32 2147483647, %v147
        %v212 = vand.u32 2147483647, %v148
        %v213 = vand.u32 2147483647, %v149
        %v214 = vand.u32 2147483647, %v150
        %v215 = vand.u32 2147483647, %v151
        %v216 = vand.u32 2147483647, %v152
        %v217 = vand.u32 2147483647, %v153
        %v218 = vand.u32 2147483647, %v154
        %v219 = vand.u32 2147483647, %v155
        %v220 = vand.u32 2147483647, %v156
        %v221 = vand.u32 2147483647, %v157
        %v222 = vand.u32 2147483647, %v158
        %v223 = vand.u32 2147483647, %v159
        %v224 = vand.u32 2147483647, %v160
        %v225 = vand.u32 2147483647, %v161
        %v226 = vand.u32 2147483647, %v162
        %v227 = vand.u32 2147483647, %v163
        %v228 = vand.u32 2147483647, %v164
        %v229 = vand.u32 2147483647, %v165
        %v230 = vand.u32 2147483647, %v166
        %v231 = vand.u32 2147483647, %v167
        %v232 = vand.u32 2147483647, %v168
        %v233 = vand.u32 2147483647, %v169
        %v234 = vand.u32 2147483647, %v170
        %v235 = vand.u32 2147483647, %v171
        %v236 = vand.u32 2147483647, %v172
        %v237 = vand.u32 2147483647, %v173
        %v238 = vand.u32 2147483647, %v174
        %v239 = vand.u32 2147483647, %v175
        %v240 = vand.u32 2147483647, %v176
        %v241 = vand.u32 2147483647, %v177
        %v242 = vand.u32 2147483647, %v178
        %v243 = vand.u32 2147483647, %v179
        %v244 = vand.u32 2147483647, %v180
        %v245 = vand.u32 2147483647, %v181
        %v246 = vand.u32 2147483647, %v182
        %v247 = vand.u32 2147483647, %v183
        %v248 = vand.u32 2147483647, %v184
        %v249 = vand.u32 2147483647, %v185
        %v250 = vand.u32 2147483647, %v186
        %v251 = vand.u32 2147483647, %v187
        %v252 = vand.u32 2147483647, %v188
        %v253 = vand.u32 2147483647, %v189
        %v254 = vand.u32 2147483647, %v190
        %v255 = vand.u32 2147483647, %v191
        %v256 = vand.u32 2147483647, %v192
        %v257 = vand.u32 2147483647, %v193
        %v258 = vand.u32 2147483647, %v194
        %v259 = vand.u32 2147483647, %v195
        %v260 = vand.u32 2147483647, %v196
        %v261 = vand.u32 2147483647, %v197
        %v262 = vand.u32 2147483647, %v198
        %v263 = vand.u32 2147483647, %v199
        %v264 = vand.u32 2147483647, %v200
        %v265 = vand.u32 2147483647, %v201
        %266 = vst [vmem:[%s135] sm:$0xff] %v202
        %267 = vst [vmem:[%s135 + $0x8] sm:$0xff] %v203
        %268 = vst [vmem:[%s135 + $0x10] sm:$0xff] %v204
        %269 = vst [vmem:[%s135 + $0x18] sm:$0xff] %v205
        %270 = vst [vmem:[%s135 + $0x20] sm:$0xff] %v206
        %271 = vst [vmem:[%s135 + $0x28] sm:$0xff] %v207
        %272 = vst [vmem:[%s135 + $0x30] sm:$0xff] %v208
        %273 = vst [vmem:[%s135 + $0x38] sm:$0xff] %v209
        %274 = vst [vmem:[%s135 + $0x40] sm:$0xff] %v210
        %275 = vst [vmem:[%s135 + $0x48] sm:$0xff] %v211
        %276 = vst [vmem:[%s135 + $0x50] sm:$0xff] %v212
        %277 = vst [vmem:[%s135 + $0x58] sm:$0xff] %v213
        %278 = vst [vmem:[%s135 + $0x60] sm:$0xff] %v214
        %279 = vst [vmem:[%s135 + $0x68] sm:$0xff] %v215
        %280 = vst [vmem:[%s135 + $0x70] sm:$0xff] %v216
        %281 = vst [vmem:[%s135 + $0x78] sm:$0xff] %v217
        %282 = vst [vmem:[%s135 + $0x80] sm:$0xff] %v218
        %283 = vst [vmem:[%s135 + $0x88] sm:$0xff] %v219
        %284 = vst [vmem:[%s135 + $0x90] sm:$0xff] %v220
        %285 = vst [vmem:[%s135 + $0x98] sm:$0xff] %v221
        %286 = vst [vmem:[%s135 + $0xa0] sm:$0xff] %v222
        %287 = vst [vmem:[%s135 + $0xa8] sm:$0xff] %v223
        %288 = vst [vmem:[%s135 + $0xb0] sm:$0xff] %v224
        %289 = vst [vmem:[%s135 + $0xb8] sm:$0xff] %v225
        %290 = vst [vmem:[%s135 + $0xc0] sm:$0xff] %v226
        %291 = vst [vmem:[%s135 + $0xc8] sm:$0xff] %v227
        %292 = vst [vmem:[%s135 + $0xd0] sm:$0xff] %v228
        %293 = vst [vmem:[%s135 + $0xd8] sm:$0xff] %v229
        %294 = vst [vmem:[%s135 + $0xe0] sm:$0xff] %v230
        %295 = vst [vmem:[%s135 + $0xe8] sm:$0xff] %v231
        %296 = vst [vmem:[%s135 + $0xf0] sm:$0xff] %v232
        %297 = vst [vmem:[%s135 + $0xf8] sm:$0xff] %v233
        %298 = vst [vmem:[%s135 + $0x100] sm:$0xff] %v234
        %299 = vst [vmem:[%s135 + $0x108] sm:$0xff] %v235
        %300 = vst [vmem:[%s135 + $0x110] sm:$0xff] %v236
        %301 = vst [vmem:[%s135 + $0x118] sm:$0xff] %v237
        %302 = vst [vmem:[%s135 + $0x120] sm:$0xff] %v238
        %303 = vst [vmem:[%s135 + $0x128] sm:$0xff] %v239
        %304 = vst [vmem:[%s135 + $0x130] sm:$0xff] %v240
        %305 = vst [vmem:[%s135 + $0x138] sm:$0xff] %v241
        %306 = vst [vmem:[%s135 + $0x140] sm:$0xff] %v242
        %307 = vst [vmem:[%s135 + $0x148] sm:$0xff] %v243
        %308 = vst [vmem:[%s135 + $0x150] sm:$0xff] %v244
        %309 = vst [vmem:[%s135 + $0x158] sm:$0xff] %v245
        %310 = vst [vmem:[%s135 + $0x160] sm:$0xff] %v246
        %311 = vst [vmem:[%s135 + $0x168] sm:$0xff] %v247
        %312 = vst [vmem:[%s135 + $0x170] sm:$0xff] %v248
        %313 = vst [vmem:[%s135 + $0x178] sm:$0xff] %v249
        %314 = vst [vmem:[%s135 + $0x180] sm:$0xff] %v250
        %315 = vst [vmem:[%s135 + $0x188] sm:$0xff] %v251
        %316 = vst [vmem:[%s135 + $0x190] sm:$0xff] %v252
        %317 = vst [vmem:[%s135 + $0x198] sm:$0xff] %v253
        %318 = vst [vmem:[%s135 + $0x1a0] sm:$0xff] %v254
        %319 = vst [vmem:[%s135 + $0x1a8] sm:$0xff] %v255
        %320 = vst [vmem:[%s135 + $0x1b0] sm:$0xff] %v256
        %321 = vst [vmem:[%s135 + $0x1b8] sm:$0xff] %v257
        %322 = vst [vmem:[%s135 + $0x1c0] sm:$0xff] %v258
        %323 = vst [vmem:[%s135 + $0x1c8] sm:$0xff] %v259
        %324 = vst [vmem:[%s135 + $0x1d0] sm:$0xff] %v260
        %325 = vst [vmem:[%s135 + $0x1d8] sm:$0xff] %v261
        %326 = vst [vmem:[%s135 + $0x1e0] sm:$0xff] %v262
        %327 = vst [vmem:[%s135 + $0x1e8] sm:$0xff] %v263
        %328 = vst [vmem:[%s135 + $0x1f0] sm:$0xff] %v264
        %329 = vst [vmem:[%s135 + $0x1f8] sm:$0xff] %v265
        %s330 = sand.u32 %s52, 1
        %s331 = scalar_lea.sflag [#allocation4], %s330
        %s332 = sand.u32 %s52, 1
        %s333 = smul.addr %s332, 512
        %s334 = scalar_lea.vmem [#allocation5], %s333
        // Predicated region
        $region29: #{tpu_custom_call.1} parent=23 // pred_check
          %p335 = pneg %p62
        $region30: #{tpu_custom_call.1} parent=23 // pred_check_branch
          %337 = sbr.rel (%p335) target = $region32
        $region31: #{tpu_custom_call.1} parent=23 // pred_region
          %s338 = smul.u32 8, %s18
          %s340 = ssub.s32 8192, 8192
          %341 = vsyncadd %s331, %s340
          %s342 = smul.addr %s338, 8
          %s343 = smul.addr %s342, 128
          %s344 = scalar_lea.hbm %s1, %s343
          %s345 = sshll.u32 %s334, 4
          %s346 = int_to_ptr.vmem [resolvable:$true] %s345
          %351 = dma.vmem_to_hbm [thread:$0]  %s346, 8192, %s344, %s331, 1024, 1024, 64
        $region32: #{tpu_custom_call.1} parent=23 // pred_fallthru
          _
      $region24: #{tpu_custom_call.1} parent=5 // pred_fallthru
        _
      %p352 = scmp.le.s32.totalorder 2, %s13
      // Predicated region
      $region33: #{tpu_custom_call.1} parent=5 // pred_check
        %p353 = pneg %p352
      $region34: #{tpu_custom_call.1} parent=5 // pred_check_branch
        %355 = sbr.rel (%p353) target = $region36
      $region35: #{tpu_custom_call.1} parent=5 // pred_region
        %s356 = ssub.s32 %s13, 2
        // Predicated region
        $region37: #{tpu_custom_call.1} parent=35 // pred_check
          %p357 = pneg %p68
        $region38: #{tpu_custom_call.1} parent=35 // pred_check_branch
          %359 = sbr.rel (%p357) target = $region40
        $region39: #{tpu_custom_call.1} parent=35 // pred_region
          %s360 = sand.u32 %s53, 1
          %s361 = scalar_lea.sflag [#allocation4], %s360
          %s362 = sand.u32 %s53, 1
          %s363 = smul.addr %s362, 512
          %s364 = scalar_lea.vmem [#allocation5], %s363
          %365 = dma.done %s361, 8192
        $region40: #{tpu_custom_call.1} parent=35 // pred_fallthru
          _
      $region36: #{tpu_custom_call.1} parent=5 // pred_fallthru
        _
    $region6: #{tpu_custom_call.1} parent=1 // loop_footer
      %s17 = sadd.s32 1, %s13
    $region7: #{tpu_custom_call.1} parent=1 // loop_footer_branch
      %12 = sbr.rel target = $region3
    $region8: #{tpu_custom_call.1} parent=1 // loop_exit
      _
    %366 = vsyncpa [#allocation3], 1
    %s367 = scalar_lea.sflag [#allocation3], 1
    %368 = vsyncpa %s367, 1
    %369 = vsyncpa [#allocation4], 1
    %s370 = scalar_lea.sflag [#allocation4], 1
    %371 = vsyncpa %s370, 1

</llo_original>
